<compile_context>
chip_gen: v5e
topology: v5e:2x2
jax: 0.10.0
libtpu: 0.0.40
codegen_flags: <defaults>
</compile_context>

<pallas_src>
import functools

import jax
import jax.numpy as jnp
from jax.experimental import pallas as pl
from jax.experimental.pallas import tpu as pltpu


def _round_up(x: int, m: int) -> int:
    return ((x + m - 1) // m) * m


def _focal_cosine_kernel(x_ref, t_ref, loss_ref, *, alpha, gamma, xent, n_valid, rt):
    """Fused per-row FocalCosine loss for one (rt, C) block of logits."""
    x = x_ref[...].astype(jnp.float32)            # (R, C) logits
    t = t_ref[...]                                # (R, 1) int32 targets
    r, c = x.shape

    # Target logit picked out with a lane-iota compare (no gather, no f32 one-hot).
    lane = jax.lax.broadcasted_iota(jnp.int32, (r, c), 1)
    dot = jnp.sum(jnp.where(lane == t, x, 0.0), axis=-1, keepdims=True)  # (R,1) x[i,t[i]]
    sq = jnp.sum(x * x, axis=-1, keepdims=True)                          # (R,1) ||x_i||^2

    # 1 / max(||x_i||, 1e-12) -- rsqrt routes to the EUP slot (free vs. VALU chain).
    inv_norm = jax.lax.rsqrt(jnp.maximum(sq, 1e-24))
    z_t = dot * inv_norm                          # cos(x_i, one_hot) == normalized target logit

    # --- cosine embedding loss vs. one-hot target (y = +1): 1 - cos ---
    cosine_loss = 1.0 - z_t

    # --- cross entropy on L2-normalized logits (F.normalize, eps=1e-12) ---
    # z in [-1, 1] so exp(z) cannot overflow: no max-shift needed.
    z = x * inv_norm
    lse = jnp.log(jnp.sum(jnp.exp(z), axis=-1, keepdims=True))
    ce = lse - z_t                                # (R, 1) per-sample CE

    # --- focal reweighting ---
    pt = jnp.exp(-ce)
    focal = alpha * (1.0 - pt) ** gamma * ce

    per_row = cosine_loss + xent * focal          # (R, 1)

    # Mask rows that only exist because of padding to a multiple of rt.
    row0 = pl.program_id(0) * rt
    row_id = row0 + jax.lax.broadcasted_iota(jnp.int32, (r, 1), 0)
    per_row = jnp.where(row_id < n_valid, per_row, 0.0)

    loss_ref[...] = per_row.astype(loss_ref.dtype)


def focal_cosine_loss(logits, target, alpha=1, gamma=2, xent=0.1,
                      block_bytes=6 * 1024 * 1024):
    """Pallas FocalCosineLoss (reduction='mean'). logits: (N, C) float, target: (N,) int."""
    n, c = logits.shape
    target = target.astype(jnp.int32)

    c_pad = _round_up(c, 128)                 # lane-padded width in VMEM
    n_pad8 = _round_up(n, 8)

    # Row tile: multiple of 8, sized from VMEM-padded bytes per row (logits block +
    # the 128-lane-padded target column, both double-buffered by BlockSpec).
    rt = max(8, (block_bytes // (4 * (c_pad + 128))) // 8 * 8)
    # Keep the grid at >= 2 steps so v7x's two TensorCores both get work.
    rt = min(rt, max(8, _round_up(pl.cdiv(n_pad8, 2), 8)))
    rt = min(rt, n_pad8)

    n_pad = _round_up(n, rt)
    if n_pad != n:
        # Padded rows produce finite values and are masked to 0 inside the kernel.
        logits = jnp.pad(logits, ((0, n_pad - n), (0, 0)))
        target = jnp.pad(target, (0, n_pad - n))
    t2d = target.reshape(n_pad, 1)

    kernel = functools.partial(_focal_cosine_kernel, alpha=alpha, gamma=gamma,
                               xent=xent, n_valid=n, rt=rt)
    per_row = pl.pallas_call(
        kernel,
        out_shape=jax.ShapeDtypeStruct((n_pad, 1), jnp.float32),
        grid_spec=pltpu.PrefetchScalarGridSpec(
            num_scalar_prefetch=0,
            grid=(n_pad // rt,),
            in_specs=[pl.BlockSpec((rt, c), lambda i: (i, 0)),
                      pl.BlockSpec((rt, 1), lambda i: (i, 0))],
            out_specs=pl.BlockSpec((rt, 1), lambda i: (i, 0)),
        ),
        compiler_params=pltpu.CompilerParams(
            dimension_semantics=("parallel",),
            vmem_limit_bytes=32 * 1024 * 1024),
    )(logits, t2d)

    # Padded rows were zeroed in-kernel; mean over the true N rows.
    return jnp.sum(per_row) / n


def focal_cosine_loss_ref(logits, target, alpha=1, gamma=2, xent=0.1):
    """Pure-JAX reference mirroring the PyTorch forward."""
    x = logits.astype(jnp.float32)
    _, c = x.shape
    onehot = jax.nn.one_hot(target, c, dtype=jnp.float32)
    dot = jnp.sum(x * onehot, axis=-1)
    sq = jnp.sum(x * x, axis=-1)

    cos = dot / jnp.maximum(jnp.sqrt(sq), 1e-8)
    cosine_loss = jnp.mean(1.0 - cos)

    z = x / jnp.maximum(jnp.sqrt(sq), 1e-12)[:, None]
    lse = jax.scipy.special.logsumexp(z, axis=-1)
    z_t = jnp.take_along_axis(z, target[:, None].astype(jnp.int32), axis=-1)[:, 0]
    ce = lse - z_t
    pt = jnp.exp(-ce)
    focal = jnp.mean(alpha * (1.0 - pt) ** gamma * ce)
    return cosine_loss + xent * focal


if __name__ == "__main__":
    key = jax.random.PRNGKey(0)
    kx, kt = jax.random.split(key)

    # Logits (batch, num_classes) + integer class targets, matching the module.
    N, C = 64, 32
    x = jax.random.normal(kx, (N, C), dtype=jnp.float32)
    tgt = jax.random.randint(kt, (N,), 0, C, dtype=jnp.int32)

    out = jax.block_until_ready(focal_cosine_loss(x, tgt))
    ref = focal_cosine_loss_ref(x, tgt)
    assert out.shape == ()
    assert jnp.allclose(out, ref, atol=1e-4, rtol=1e-4), (out, ref)

    # Ragged batch size / odd class count exercising the row-padding + masking path.
    N2, C2 = 37, 10
    x2 = jax.random.normal(kx, (N2, C2), dtype=jnp.float32)
    t2 = jax.random.randint(kt, (N2,), 0, C2, dtype=jnp.int32)
    out2 = jax.block_until_ready(focal_cosine_loss(x2, t2))
    ref2 = focal_cosine_loss_ref(x2, t2)
    assert jnp.allclose(out2, ref2, atol=1e-4, rtol=1e-4), (out2, ref2)

    print("KERNEL_OK")
</pallas_src>

<mosaic_0001>
module attributes {stable_mosaic.version = 11 : i64} {
  func.func @_focal_cosine_kernel(%arg0: i32, %arg1: memref<32x32xf32, #tpu.memory_space<vmem>>, %arg2: memref<32x1xi32, #tpu.memory_space<vmem>>, %arg3: memref<32x1xf32, #tpu.memory_space<vmem>>) attributes {dimension_semantics = [#tpu.dimension_semantics<parallel>], iteration_bounds = array<i64: 2>, scalar_prefetch = 0 : i64, scratch_operands = 0 : i64, tpu.core_type = #tpu.core_type<tc>, window_params = [{transform_indices = @transform_0, window_bounds = array<i64: 32, 32>}, {transform_indices = @transform_1, window_bounds = array<i64: 32, 1>}, {transform_indices = @transform_2, window_bounds = array<i64: 32, 1>}]} {
    %c0 = arith.constant 0 : index
    %c0_0 = arith.constant 0 : index
    %0 = vector.load %arg1[%c0, %c0_0] : memref<32x32xf32, #tpu.memory_space<vmem>>, vector<32x32xf32>
    %c0_1 = arith.constant 0 : index
    %c0_2 = arith.constant 0 : index
    %1 = vector.load %arg2[%c0_1, %c0_2] : memref<32x1xi32, #tpu.memory_space<vmem>>, vector<32x1xi32>
    %2 = tpu.iota {dimensions = array<i32: 1>} : vector<32x32xi32>
    %3 = vector.broadcast %1 : vector<32x1xi32> to vector<32x32xi32>
    %4 = arith.cmpi eq, %2, %3 : vector<32x32xi32>
    %cst = arith.constant 0.000000e+00 : f32
    %5 = vector.broadcast %cst : f32 to vector<32x32xf32>
    %6 = arith.select %4, %0, %5 : vector<32x32xi1>, vector<32x32xf32>
    %cst_3 = arith.constant dense<0.000000e+00> : vector<32xf32>
    %7 = vector.multi_reduction <add>, %6, %cst_3 [1] : vector<32x32xf32> to vector<32xf32>
    %8 = vector.shape_cast %7 : vector<32xf32> to vector<32x1xf32>
    %9 = arith.mulf %0, %0 : vector<32x32xf32>
    %cst_4 = arith.constant dense<0.000000e+00> : vector<32xf32>
    %10 = vector.multi_reduction <add>, %9, %cst_4 [1] : vector<32x32xf32> to vector<32xf32>
    %11 = vector.shape_cast %10 : vector<32xf32> to vector<32x1xf32>
    %cst_5 = arith.constant 1.000000e-24 : f32
    %12 = vector.broadcast %cst_5 : f32 to vector<32x1xf32>
    %13 = arith.maximumf %11, %12 : vector<32x1xf32>
    %14 = math.rsqrt %13 : vector<32x1xf32>
    %15 = arith.mulf %8, %14 : vector<32x1xf32>
    %cst_6 = arith.constant 1.000000e+00 : f32
    %16 = vector.broadcast %cst_6 : f32 to vector<32x1xf32>
    %17 = arith.subf %16, %15 : vector<32x1xf32>
    %18 = vector.broadcast %14 : vector<32x1xf32> to vector<32x32xf32>
    %19 = arith.mulf %0, %18 : vector<32x32xf32>
    %20 = math.exp %19 : vector<32x32xf32>
    %cst_7 = arith.constant dense<0.000000e+00> : vector<32xf32>
    %21 = vector.multi_reduction <add>, %20, %cst_7 [1] : vector<32x32xf32> to vector<32xf32>
    %22 = vector.shape_cast %21 : vector<32xf32> to vector<32x1xf32>
    %23 = math.log %22 : vector<32x1xf32>
    %24 = arith.subf %23, %15 : vector<32x1xf32>
    %cst_8 = arith.constant 0.000000e+00 : f32
    %25 = vector.broadcast %cst_8 : f32 to vector<32x1xf32>
    %26 = arith.subf %25, %24 : vector<32x1xf32>
    %27 = math.exp %26 : vector<32x1xf32>
    %cst_9 = arith.constant 1.000000e+00 : f32
    %28 = vector.broadcast %cst_9 : f32 to vector<32x1xf32>
    %29 = arith.subf %28, %27 : vector<32x1xf32>
    %30 = arith.mulf %29, %29 : vector<32x1xf32>
    %cst_10 = arith.constant 1.000000e+00 : f32
    %31 = vector.broadcast %cst_10 : f32 to vector<32x1xf32>
    %32 = arith.mulf %31, %30 : vector<32x1xf32>
    %33 = arith.mulf %32, %24 : vector<32x1xf32>
    %cst_11 = arith.constant 1.000000e-01 : f32
    %34 = vector.broadcast %cst_11 : f32 to vector<32x1xf32>
    %35 = arith.mulf %34, %33 : vector<32x1xf32>
    %36 = arith.addf %17, %35 : vector<32x1xf32>
    %c32_i32 = arith.constant 32 : i32
    %37 = arith.muli %arg0, %c32_i32 : i32
    %38 = tpu.iota {dimensions = array<i32: 0>} : vector<32x1xi32>
    %39 = vector.broadcast %37 : i32 to vector<32x1xi32>
    %40 = arith.addi %39, %38 : vector<32x1xi32>
    %c64_i32 = arith.constant 64 : i32
    %41 = vector.broadcast %c64_i32 : i32 to vector<32x1xi32>
    %42 = arith.cmpi slt, %40, %41 : vector<32x1xi32>
    %cst_12 = arith.constant 0.000000e+00 : f32
    %43 = vector.broadcast %cst_12 : f32 to vector<32x1xf32>
    %44 = arith.select %42, %36, %43 : vector<32x1xi1>, vector<32x1xf32>
    %c0_13 = arith.constant 0 : index
    %c0_14 = arith.constant 0 : index
    %45 = vector.load %arg3[%c0_13, %c0_14] : memref<32x1xf32, #tpu.memory_space<vmem>>, vector<32x1xf32>
    tpu.vector_store %arg3[%c0_13, %c0_14], %44 {strides = array<i32>} : memref<32x1xf32, #tpu.memory_space<vmem>>, vector<32x1xf32>,
    return
  }
  func.func @transform_0(%arg0: i32) -> (i32, i32) {
    %c0_i32 = arith.constant 0 : i32
    %c0_i32_0 = arith.constant 0 : i32
    return %arg0, %c0_i32 : i32, i32
  }
  func.func @transform_1(%arg0: i32) -> (i32, i32) {
    %c0_i32 = arith.constant 0 : i32
    %c0_i32_0 = arith.constant 0 : i32
    return %arg0, %c0_i32 : i32, i32
  }
  func.func @transform_2(%arg0: i32) -> (i32, i32) {
    %c0_i32 = arith.constant 0 : i32
    %c0_i32_0 = arith.constant 0 : i32
    return %arg0, %c0_i32 : i32, i32
  }
}

</mosaic_0001>

<llo_original>
// kernel: tpu_custom_call.1
$region0: #{tpu_custom_call.1}
  #allocation0 [shape = 'u32[]', space=smem, size = 0x4, offset = 0x4, fixed_abs, tag = 'smem constant byte address 0x4 - core index']
  #allocation1 [shape = 'u32[72,128]{1,0:T(1,128)}', space=vmem, size = 0x9000, scoped, tag = 'internal scratch']
  %s0 = inlined_call_operand.vmem [shape: f32[64,32], index: 0, kind: input, shape index: {}]
  %s1 = inlined_call_operand.vmem [shape: s32[64,1], index: 1, kind: input, shape index: {}]
  %s2 = inlined_call_operand.vmem [shape: f32[64,1], index: 2, kind: output, shape index: {}]
  %s3 = sld [smem:[#allocation0]]
  $region41: #{tpu_custom_call.1} parent=0
    _
  %s5 = ssub.s32 1, %s3
  %s6 = scalar_select 0, %s5, %s3
  loop: start=0, step=1, limit=4
  $region2: #{tpu_custom_call.1} parent=0 // loop_pre_header
    _
  $region3: #{tpu_custom_call.1} parent=0 // loop_header
    %s8 = sphi 0, %s12
    %p9 = scmp.ge.s32.totalorder %s8, 4
    %s18 = sphi 0, %s20
    %s21 = sphi 0, %s18
    %s22 = sphi 0, %s21
    %s38 = sphi 0, %s22
    %s44 = sphi 0, %s46
    %s47 = sphi 0, %s44
    %s48 = sphi 0, %s47
    %s64 = sphi 0, %s48
    %s70 = sphi 0, %s72
    %s73 = sphi 0, %s70
    %s74 = sphi 0, %s73
    %s90 = sphi 0, %s74
  $region4: #{tpu_custom_call.1} parent=0 // loop_header_branch
    %11 = sbr.rel (%p9) target = $region8
  $region5: #{tpu_custom_call.1} parent=0 // loop_body
    %s13 = ssub.s32 %s8, 1
    %s14 = ssub.s32 %s8, 2
    %s15 = sadd.s32 %s8, 1
    %s16 = ssub.s32 %s8, %s15
    %p17 = scmp.eq.s32.totalorder %s16, 0
    %s19 = sadd.s32 %s18, 1
    %s20 = scalar_select %p17, %s18, %s19
    %p23 = pneg %p17
    %p24 = scmp.eq.s32.totalorder %s8, 1
    %p25 = por %p23, %p24
    %p26 = scmp.ne.s32.totalorder %s18, %s21
    %p27 = scmp.eq.s32.totalorder %s8, 0
    %p28 = por %p26, %p27
    %p29 = scmp.ne.s32.totalorder %s18, %s21
    %p30 = scmp.eq.s32.totalorder %s13, 1
    %p31 = por %p29, %p30
    %p32 = scmp.ne.s32.totalorder %s21, %s22
    %p33 = scmp.eq.s32.totalorder %s13, 0
    %p34 = por %p32, %p33
    %p35 = scmp.ne.s32.totalorder %s21, %s22
    %p36 = scmp.eq.s32.totalorder %s14, 1
    %p37 = por %p35, %p36
    %p39 = scmp.ne.s32.totalorder %s22, %s38
    %p40 = scmp.eq.s32.totalorder %s14, 0
    %p41 = por %p39, %p40
    %s42 = ssub.s32 %s8, %s15
    %p43 = scmp.eq.s32.totalorder %s42, 0
    %s45 = sadd.s32 %s44, 1
    %s46 = scalar_select %p43, %s44, %s45
    %p49 = pneg %p43
    %p50 = scmp.eq.s32.totalorder %s8, 1
    %p51 = por %p49, %p50
    %p52 = scmp.ne.s32.totalorder %s44, %s47
    %p53 = scmp.eq.s32.totalorder %s8, 0
    %p54 = por %p52, %p53
    %p55 = scmp.ne.s32.totalorder %s44, %s47
    %p56 = scmp.eq.s32.totalorder %s13, 1
    %p57 = por %p55, %p56
    %p58 = scmp.ne.s32.totalorder %s47, %s48
    %p59 = scmp.eq.s32.totalorder %s13, 0
    %p60 = por %p58, %p59
    %p61 = scmp.ne.s32.totalorder %s47, %s48
    %p62 = scmp.eq.s32.totalorder %s14, 1
    %p63 = por %p61, %p62
    %p65 = scmp.ne.s32.totalorder %s48, %s64
    %p66 = scmp.eq.s32.totalorder %s14, 0
    %p67 = por %p65, %p66
    %s68 = ssub.s32 %s8, %s15
    %p69 = scmp.eq.s32.totalorder %s68, 0
    %s71 = sadd.s32 %s70, 1
    %s72 = scalar_select %p69, %s70, %s71
    %p75 = pneg %p69
    %p76 = scmp.eq.s32.totalorder %s8, 1
    %p77 = por %p75, %p76
    %p78 = scmp.ne.s32.totalorder %s70, %s73
    %p79 = scmp.eq.s32.totalorder %s8, 0
    %p80 = por %p78, %p79
    %p81 = scmp.ne.s32.totalorder %s70, %s73
    %p82 = scmp.eq.s32.totalorder %s13, 1
    %p83 = por %p81, %p82
    %p84 = scmp.ne.s32.totalorder %s73, %s74
    %p85 = scmp.eq.s32.totalorder %s13, 0
    %p86 = por %p84, %p85
    %p87 = scmp.ne.s32.totalorder %s73, %s74
    %p88 = scmp.eq.s32.totalorder %s14, 1
    %p89 = por %p87, %p88
    %p91 = scmp.ne.s32.totalorder %s74, %s90
    %p92 = scmp.eq.s32.totalorder %s14, 0
    %p93 = por %p91, %p92
    %p94 = scmp.le.s32.totalorder 1, %s8
    %p95 = scmp.lt.s32.totalorder %s8, 3
    %p96 = pnand %p94, %p95
    %p97 = pneg %p96
    // Predicated region
    $region9: #{tpu_custom_call.1} parent=5 // pred_check
      _
    $region10: #{tpu_custom_call.1} parent=5 // pred_check_branch
      %99 = sbr.rel (%p96) target = $region12
    $region11: #{tpu_custom_call.1} parent=5 // pred_region
      %s100 = ssub.s32 %s8, 1
    $region12: #{tpu_custom_call.1} parent=5 // pred_fallthru
      _
    %p101 = scmp.lt.s32.totalorder %s8, 2
    // Predicated region
    $region13: #{tpu_custom_call.1} parent=5 // pred_check
      %p102 = pneg %p101
    $region14: #{tpu_custom_call.1} parent=5 // pred_check_branch
      %104 = sbr.rel (%p102) target = $region16
    $region15: #{tpu_custom_call.1} parent=5 // pred_region
      // Predicated region
      $region17: #{tpu_custom_call.1} parent=15 // pred_check
        %p105 = pneg %p28
      $region18: #{tpu_custom_call.1} parent=15 // pred_check_branch
        %107 = sbr.rel (%p105) target = $region20
      $region19: #{tpu_custom_call.1} parent=15 // pred_region
        %s108 = smul.u32 4, %s8
        %p109 = scmp.lt.s32.totalorder %s108, 7
        %s110 = scalar_select %p109, %s108, 7
        %s111 = smul.addr %s110, 8
        %s112 = scalar_lea.vmem %s0, %s111
        %s113 = smul.u32 4, %s8
      $region20: #{tpu_custom_call.1} parent=15 // pred_fallthru
        _
      // Predicated region
      $region21: #{tpu_custom_call.1} parent=15 // pred_check
        %p114 = pneg %p54
      $region22: #{tpu_custom_call.1} parent=15 // pred_check_branch
        %116 = sbr.rel (%p114) target = $region24
      $region23: #{tpu_custom_call.1} parent=15 // pred_region
        %s117 = smul.u32 4, %s8
        %p118 = scmp.lt.s32.totalorder %s117, 7
        %s119 = scalar_select %p118, %s117, 7
        %s120 = smul.addr %s119, 8
        %s121 = scalar_lea.vmem %s1, %s120
        %s122 = smul.u32 4, %s8
      $region24: #{tpu_custom_call.1} parent=15 // pred_fallthru
        _
    $region16: #{tpu_custom_call.1} parent=5 // pred_fallthru
      _
    %p123 = scmp.le.s32.totalorder 1, %s8
    %p124 = scmp.lt.s32.totalorder %s8, 3
    %p125 = pnand %p123, %p124
    %p126 = pneg %p125
    // Predicated region
    $region25: #{tpu_custom_call.1} parent=5 // pred_check
      _
    $region26: #{tpu_custom_call.1} parent=5 // pred_check_branch
      %128 = sbr.rel (%p125) target = $region28
    $region27: #{tpu_custom_call.1} parent=5 // pred_region
      %s129 = ssub.s32 %s8, 1
      %s130 = smul.u32 4, %s13
      %p131 = scmp.lt.s32.totalorder %s130, 7
      %s132 = scalar_select %p131, %s130, 7
      %s133 = smul.addr %s132, 8
      %s134 = scalar_lea.vmem %s0, %s133
      %p135 = pneg %p34
      %p136 = pneg %p31
      %s137 = smul.u32 4, %s13
      %p138 = scmp.lt.s32.totalorder %s137, 7
      %s139 = scalar_select %p138, %s137, 7
      %s140 = smul.addr %s139, 8
      %s141 = scalar_lea.vmem %s1, %s140
      %p142 = pneg %p60
      %p143 = pneg %p57
      %p144 = pneg %p86
      %p145 = pneg %p83
      %s146 = smul.u32 4, %s13
      %p147 = scmp.lt.s32.totalorder %s146, 7
      %s148 = scalar_select %p147, %s146, 7
      %s149 = smul.addr %s148, 8
      %s150 = scalar_lea.vmem %s2, %s149
      %s151 = smul.u32 4, %s13
      %p152 = scmp.lt.s32.totalorder %s151, 7
      %s153 = scalar_select %p152, %s151, 7
      %s154 = smul.addr %s153, 8
      %s155 = scalar_lea.vmem %s0, %s154
      %s156 = smul.u32 4, %s13
      %s157 = smul.u32 4, %s13
      %p158 = scmp.lt.s32.totalorder %s157, 7
      %s159 = scalar_select %p158, %s157, 7
      %s160 = smul.addr %s159, 8
      %s161 = scalar_lea.vmem %s1, %s160
      %s162 = smul.u32 4, %s13
      %s163 = smul.u32 4, %s13
      %p164 = scmp.lt.s32.totalorder %s163, 7
      %s165 = scalar_select %p164, %s163, 7
      %s166 = smul.addr %s165, 8
      %s167 = scalar_lea.vmem %s2, %s166
      %s168 = smul.u32 4, %s13
      %v169 = vld [vmem:[%s155] sm:$0xff]
      %v170 = vld [vmem:[%s155 + $0x8] sm:$0xff]
      %v171 = vld [vmem:[%s155 + $0x10] sm:$0xff]
      %v172 = vld [vmem:[%s155 + $0x18] sm:$0xff]
      %v173 = vld [vmem:[%s161] sm:$0xff]
      %v174 = vld [vmem:[%s161 + $0x8] sm:$0xff]
      %v175 = vld [vmem:[%s161 + $0x10] sm:$0xff]
      %v176 = vld [vmem:[%s161 + $0x18] sm:$0xff]
      %v177 = vlaneseq
      %v178 = vand.u32 %v177, 127
      %179 = vset.pattern.permute.xlu0 0
      %180 = vperm.xlu0 %179, %v173
      %v181 = vpop.permute.xlu0 %180
      %182 = vset.pattern.permute.xlu0 0
      %183 = vperm.xlu0 %182, %v174
      %v184 = vpop.permute.xlu0 %183
      %185 = vset.pattern.permute.xlu0 0
      %186 = vperm.xlu0 %185, %v175
      %v187 = vpop.permute.xlu0 %186
      %188 = vset.pattern.permute.xlu0 0
      %189 = vperm.xlu0 %188, %v176
      %v190 = vpop.permute.xlu0 %189
      %vm191 = vcmp.eq.s32.totalorder %v178, %v181
      %vm192 = vcmp.eq.s32.totalorder %v178, %v184
      %vm193 = vcmp.eq.s32.totalorder %v178, %v187
      %vm194 = vcmp.eq.s32.totalorder %v178, %v190
      %v195 = vsel %vm191, %v169, 0.0
      %v196 = vsel %vm192, %v170, 0.0
      %v197 = vsel %vm193, %v171, 0.0
      %v198 = vsel %vm194, %v172, 0.0
      %vm199 = vcmask 261120
      %v200 = vsel %vm199, %v195, 0.0
      %201 = vadd.xlane.f32.xlu0 %v200
      %v202 = vpop.xlane.xlu0 %201
      %v203 = vsel %vm199, %v196, 0.0
      %204 = vadd.xlane.f32.xlu0 %v203
      %v205 = vpop.xlane.xlu0 %204
      %v206 = vsel %vm199, %v197, 0.0
      %207 = vadd.xlane.f32.xlu0 %v206
      %v208 = vpop.xlane.xlu0 %207
      %v209 = vsel %vm199, %v198, 0.0
      %210 = vadd.xlane.f32.xlu0 %v209
      %v211 = vpop.xlane.xlu0 %210
      %v212 = vmul.f32 %v169, %v169
      %v213 = vmul.f32 %v170, %v170
      %v214 = vmul.f32 %v171, %v171
      %v215 = vmul.f32 %v172, %v172
      %v216 = vsel %vm199, %v212, 0.0
      %217 = vadd.xlane.f32.xlu0 %v216
      %v218 = vpop.xlane.xlu0 %217
      %v219 = vsel %vm199, %v213, 0.0
      %220 = vadd.xlane.f32.xlu0 %v219
      %v221 = vpop.xlane.xlu0 %220
      %v222 = vsel %vm199, %v214, 0.0
      %223 = vadd.xlane.f32.xlu0 %v222
      %v224 = vpop.xlane.xlu0 %223
      %v225 = vsel %vm199, %v215, 0.0
      %226 = vadd.xlane.f32.xlu0 %v225
      %v227 = vpop.xlane.xlu0 %226
      %v228 = vmax.f32 %v218, 1e-24
      %v229 = vmax.f32 %v221, 1e-24
      %v230 = vmax.f32 %v224, 1e-24
      %v231 = vmax.f32 %v227, 1e-24
      %v232 = vrsqrt.pop %v228
      %v233 = vmul.f32 %v232, %v228
      %v234 = vmul.f32 %v233, %v232
      %v235 = vmul.f32 0.5, %v234
      %v236 = vsub.f32 1.5, %v235
      %v237 = vmul.f32 %v232, %v236
      %vm238 = vweird.f32 %v228
      %vm239 = vweird.f32 %v232
      %vm240 = vmor %vm238, %vm239
      %v241 = vsel %vm240, %v232, %v237
      %v242 = vrsqrt.pop %v229
      %v243 = vmul.f32 %v242, %v229
      %v244 = vmul.f32 %v243, %v242
      %v245 = vmul.f32 0.5, %v244
      %v246 = vsub.f32 1.5, %v245
      %v247 = vmul.f32 %v242, %v246
      %vm248 = vweird.f32 %v229
      %vm249 = vweird.f32 %v242
      %vm250 = vmor %vm248, %vm249
      %v251 = vsel %vm250, %v242, %v247
      %v252 = vrsqrt.pop %v230
      %v253 = vmul.f32 %v252, %v230
      %v254 = vmul.f32 %v253, %v252
      %v255 = vmul.f32 0.5, %v254
      %v256 = vsub.f32 1.5, %v255
      %v257 = vmul.f32 %v252, %v256
      %vm258 = vweird.f32 %v230
      %vm259 = vweird.f32 %v252
      %vm260 = vmor %vm258, %vm259
      %v261 = vsel %vm260, %v252, %v257
      %v262 = vrsqrt.pop %v231
      %v263 = vmul.f32 %v262, %v231
      %v264 = vmul.f32 %v263, %v262
      %v265 = vmul.f32 0.5, %v264
      %v266 = vsub.f32 1.5, %v265
      %v267 = vmul.f32 %v262, %v266
      %vm268 = vweird.f32 %v231
      %vm269 = vweird.f32 %v262
      %vm270 = vmor %vm268, %vm269
      %v271 = vsel %vm270, %v262, %v267
      %v272 = vmul.f32 %v202, %v241
      %v273 = vmul.f32 %v205, %v251
      %v274 = vmul.f32 %v208, %v261
      %v275 = vmul.f32 %v211, %v271
      %v276 = vsub.f32 1.0, %v272
      %v277 = vsub.f32 1.0, %v273
      %v278 = vsub.f32 1.0, %v274
      %v279 = vsub.f32 1.0, %v275
      %v280 = vmul.f32 %v169, %v241
      %v281 = vmul.f32 %v170, %v251
      %v282 = vmul.f32 %v171, %v261
      %v283 = vmul.f32 %v172, %v271
      %v284 = vmul.f32 %v280, 1.442695
      %v285 = vpow.pop %v284
      %v286 = vmul.f32 %v281, 1.442695
      %v287 = vpow.pop %v286
      %v288 = vmul.f32 %v282, 1.442695
      %v289 = vpow.pop %v288
      %v290 = vmul.f32 %v283, 1.442695
      %v291 = vpow.pop %v290
      %v292 = vsel %vm199, %v285, 0.0
      %293 = vadd.xlane.f32.xlu0 %v292
      %v294 = vpop.xlane.xlu0 %293
      %v295 = vsel %vm199, %v287, 0.0
      %296 = vadd.xlane.f32.xlu0 %v295
      %v297 = vpop.xlane.xlu0 %296
      %v298 = vsel %vm199, %v289, 0.0
      %299 = vadd.xlane.f32.xlu0 %v298
      %v300 = vpop.xlane.xlu0 %299
      %v301 = vsel %vm199, %v291, 0.0
      %302 = vadd.xlane.f32.xlu0 %v301
      %v303 = vpop.xlane.xlu0 %302
      %v304 = vlog2.pop %v294
      %v305 = vmul.f32 %v304, 0.6931472
      %v306 = vlog2.pop %v297
      %v307 = vmul.f32 %v306, 0.6931472
      %v308 = vlog2.pop %v300
      %v309 = vmul.f32 %v308, 0.6931472
      %v310 = vlog2.pop %v303
      %v311 = vmul.f32 %v310, 0.6931472
      %v312 = vsub.f32 %v305, %v272
      %v313 = vsub.f32 %v307, %v273
      %v314 = vsub.f32 %v309, %v274
      %v315 = vsub.f32 %v311, %v275
      %v316 = vsub.f32 0.0, %v312
      %v317 = vsub.f32 0.0, %v313
      %v318 = vsub.f32 0.0, %v314
      %v319 = vsub.f32 0.0, %v315
      %v320 = vmul.f32 %v316, 1.442695
      %v321 = vpow.pop %v320
      %v322 = vmul.f32 %v317, 1.442695
      %v323 = vpow.pop %v322
      %v324 = vmul.f32 %v318, 1.442695
      %v325 = vpow.pop %v324
      %v326 = vmul.f32 %v319, 1.442695
      %v327 = vpow.pop %v326
      %v328 = vsub.f32 1.0, %v321
      %v329 = vsub.f32 1.0, %v323
      %v330 = vsub.f32 1.0, %v325
      %v331 = vsub.f32 1.0, %v327
      %v332 = vmul.f32 %v328, %v328
      %v333 = vmul.f32 %v329, %v329
      %v334 = vmul.f32 %v330, %v330
      %v335 = vmul.f32 %v331, %v331
      %v336 = vmul.f32 %v332, %v312
      %v337 = vmul.f32 %v333, %v313
      %v338 = vmul.f32 %v334, %v314
      %v339 = vmul.f32 %v335, %v315
      %v340 = vmul.f32 %v336, 0.1
      %v341 = vmul.f32 %v337, 0.1
      %v342 = vmul.f32 %v338, 0.1
      %v343 = vmul.f32 %v339, 0.1
      %v344 = vadd.f32 %v276, %v340
      %v345 = vadd.f32 %v277, %v341
      %v346 = vadd.f32 %v278, %v342
      %v347 = vadd.f32 %v279, %v343
      %s348 = smul.u32 %s13, 32
      %v349 = vlaneseq
      %v350 = vshrl.u32 %v349, 7
      %v351 = vadd.s32 %v350, 8
      %v352 = vadd.s32 %v350, 16
      %v353 = vadd.s32 %v350, 24
      %v354 = vstv %s348
      %v355 = vadd.s32 %v354, %v350
      %v356 = vadd.s32 %v354, %v351
      %v357 = vadd.s32 %v354, %v352
      %v358 = vadd.s32 %v354, %v353
      %vm359 = vcmp.lt.s32.totalorder %v355, 64
      %vm360 = vcmp.lt.s32.totalorder %v356, 64
      %vm361 = vcmp.lt.s32.totalorder %v357, 64
      %vm362 = vcmp.lt.s32.totalorder %v358, 64
      %v363 = vsel %vm359, %v344, 0.0
      %v364 = vsel %vm360, %v345, 0.0
      %v365 = vsel %vm361, %v346, 0.0
      %v366 = vsel %vm362, %v347, 0.0
      %vm367 = vcmask 7168
      %368 = vst.msk [vmem:[%s167] sm:$0xff] %vm367, %v363
      %369 = vst.msk [vmem:[%s167 + $0x8] sm:$0xff] %vm367, %v364
      %370 = vst.msk [vmem:[%s167 + $0x10] sm:$0xff] %vm367, %v365
      %371 = vst.msk [vmem:[%s167 + $0x18] sm:$0xff] %vm367, %v366
      %s372 = smul.u32 4, %s13
      %p373 = scmp.lt.s32.totalorder %s372, 7
      %s374 = scalar_select %p373, %s372, 7
      %s375 = smul.addr %s374, 8
      %s376 = scalar_lea.vmem %s2, %s375
      // Predicated region
      $region29: #{tpu_custom_call.1} parent=27 // pred_check
        %p377 = pneg %p83
      $region30: #{tpu_custom_call.1} parent=27 // pred_check_branch
        %379 = sbr.rel (%p377) target = $region32
      $region31: #{tpu_custom_call.1} parent=27 // pred_region
        %s380 = smul.u32 4, %s13
      $region32: #{tpu_custom_call.1} parent=27 // pred_fallthru
        _
    $region28: #{tpu_custom_call.1} parent=5 // pred_fallthru
      _
    %p381 = scmp.le.s32.totalorder 2, %s8
    // Predicated region
    $region33: #{tpu_custom_call.1} parent=5 // pred_check
      %p382 = pneg %p381
    $region34: #{tpu_custom_call.1} parent=5 // pred_check_branch
      %384 = sbr.rel (%p382) target = $region36
    $region35: #{tpu_custom_call.1} parent=5 // pred_region
      %s385 = ssub.s32 %s8, 2
      // Predicated region
      $region37: #{tpu_custom_call.1} parent=35 // pred_check
        %p386 = pneg %p89
      $region38: #{tpu_custom_call.1} parent=35 // pred_check_branch
        %388 = sbr.rel (%p386) target = $region40
      $region39: #{tpu_custom_call.1} parent=35 // pred_region
        %s389 = smul.u32 4, %s14
        %p390 = scmp.lt.s32.totalorder %s389, 7
        %s391 = scalar_select %p390, %s389, 7
        %s392 = smul.addr %s391, 8
        %s393 = scalar_lea.vmem %s2, %s392
      $region40: #{tpu_custom_call.1} parent=35 // pred_fallthru
        _
    $region36: #{tpu_custom_call.1} parent=5 // pred_fallthru
      _
  $region6: #{tpu_custom_call.1} parent=0 // loop_footer
    %s12 = sadd.s32 1, %s8
  $region7: #{tpu_custom_call.1} parent=0 // loop_footer_branch
    %7 = sbr.rel target = $region3
  $region8: #{tpu_custom_call.1} parent=0 // loop_exit
    _

</llo_original>
